<compile_context>
chip_gen: v6e
topology: v6e:2x2x1
jax: 0.10.0
libtpu: 0.0.40
codegen_flags: <defaults>
</compile_context>

<pallas_src>
import math
from functools import partial

import numpy as np
import jax
import jax.numpy as jnp
from jax.experimental import pallas as pl
from jax.experimental.pallas import tpu as pltpu


def _mha_kernel(x_ref, w_qkv_ref, b_qkv_ref, wp_ref, bp_ref, o_ref, slab_ref, *, num_heads):
    """One grid step processes a (B, T, F) block of sequences.

    x_ref:     (B, T, F)   input block
    w_qkv_ref: (F, 3F)     fused [Q|K|V] weight (MXU dtype; 1/sqrt(D) folded into Q columns)
    b_qkv_ref: (1, 3F)     fused [Q|K|V] bias (f32; 1/sqrt(D) folded into Q part)
    wp_ref:    (F, F)      c_proj weight (MXU dtype)
    bp_ref:    (1, F)      c_proj bias (f32)
    o_ref:     (B, T, F)   output block
    slab_ref:  (B, T, F)   VMEM scratch: concatenated per-head attention outputs (MXU dtype)
    """
    B, T, F = x_ref.shape
    H = num_heads
    D = F // H
    mdt = w_qkv_ref.dtype                      # MXU operand dtype (bf16 by default)

    # --- Fused Q|K|V projection: one full-width MXU matmul, f32 accumulation. ---
    x = x_ref[...].reshape(B * T, F).astype(mdt)
    qkv = jnp.dot(x, w_qkv_ref[...], preferred_element_type=jnp.float32) + b_qkv_ref[...]

    # Slices at F-aligned lane offsets (free for real ViT widths where F % 128 == 0).
    q = qkv[:, 0 * F:1 * F].reshape(B, T, F).astype(mdt)
    k = qkv[:, 1 * F:2 * F].reshape(B, T, F).astype(mdt)
    v = qkv[:, 2 * F:3 * F].reshape(B, T, F).astype(mdt)

    # --- Per-head attention; each head's output retires into the slab scratch. ---
    for h in range(H):                                         # static unroll over heads
        qh = q[:, :, h * D:(h + 1) * D]                        # (B, T, D)
        kh = k[:, :, h * D:(h + 1) * D]
        vh = v[:, :, h * D:(h + 1) * D]

        # scores[b, t, s] = qh[b, t, :] . kh[b, s, :]  (scale already folded into q), no k.T.
        s = jax.lax.dot_general(qh, kh, (((2,), (2,)), ((0,), (0,))),
                                preferred_element_type=jnp.float32)        # (B, T, T) f32
        s = s - jnp.max(s, axis=-1, keepdims=True)             # stable softmax, f32 math
        p = jnp.exp(s)
        p = p * pl.reciprocal(jnp.sum(p, axis=-1, keepdims=True), approx=True)

        attn = jax.lax.dot_general(p.astype(mdt), vh, (((2,), (1,)), ((0,), (0,))),
                                   preferred_element_type=jnp.float32)     # (B, T, D) f32
        slab_ref[:, :, h * D:(h + 1) * D] = attn.astype(slab_ref.dtype)

    # --- c_proj as ONE full-depth (B*T, F) @ (F, F) MXU matmul. ---
    slab = slab_ref[...].reshape(B * T, F)
    out = jnp.dot(slab, wp_ref[...], preferred_element_type=jnp.float32) + bp_ref[...]
    o_ref[...] = out.reshape(B, T, F).astype(o_ref.dtype)


def multi_head_attention(x, wq, bq, wk, bk, wv, bv, wp, bp, *,
                         batch_tile=None, mxu_dtype=jnp.bfloat16):
    """x: (N, T, F); wq/wk/wv: (H, F, D) used as seq @ w[h]; b*: (H, 1, D); wp: (F, F); bp: (1, F)."""
    N, T, F = x.shape
    H, _, D = wq.shape
    assert H * D == F, "num_features must be divisible by num_heads"

    inv_scale = 1.0 / math.sqrt(D)             # matches torch: scores / sqrt(query_size)
    mdt = np.dtype(mxu_dtype)

    # --- Head fusion + QKV fusion: one lane-dense (F, 3F) weight, (1, 3F) bias. ---
    def fuse_w(w):                             # (H, F, D) -> (F, H*D), columns blocked per head
        return jnp.transpose(w, (1, 0, 2)).reshape(F, H * D)

    def fuse_b(b):                             # (H, 1, D) -> (1, H*D)
        return b.reshape(1, H * D)

    w_qkv = jnp.concatenate(
        [fuse_w(wq) * inv_scale, fuse_w(wk), fuse_w(wv)], axis=1).astype(mdt)       # (F, 3F)
    b_qkv = jnp.concatenate(
        [fuse_b(bq) * inv_scale, fuse_b(bk), fuse_b(bv)], axis=1).astype(jnp.float32)
    wp_m = wp.astype(mdt)
    bp_m = bp.astype(jnp.float32)

    in_itemsize = x.dtype.itemsize
    mxu_itemsize = mdt.itemsize

    # --- VMEM budget from the actual chip (~96 MiB on v5e/v6e, ~48 MiB on v7x). ---
    try:
        vmem_cap = int(pltpu.get_tpu_info().vmem_capacity_bytes)
    except Exception:                          # hardware probe only; conservative fallback
        vmem_cap = 64 * 1024 * 1024
    vmem_limit = int(0.75 * vmem_cap)          # leave headroom for compiler scratch

    # Weights + biases are double-buffered by the pipeline (grid-invariant, but resident x2).
    weight_bytes = 2 * ((3 * F * F + F * F) * mxu_itemsize + 4 * F * 4)

    def per_step_bytes(bt):                    # live f32/bf16 intermediates for one grid step
        rows = bt * T
        io = 2 * 2 * rows * F * in_itemsize    # double-buffered x + out blocks
        qkv_f32 = rows * 3 * F * 4             # fused-projection f32 result
        qkv_m = 3 * rows * F * mxu_itemsize    # q/k/v MXU-dtype copies
        scores = 2 * bt * T * T * 4            # s and p (one head) live together, f32
        slab = rows * F * mxu_itemsize         # scratch slab
        out_f32 = rows * F * 4                 # c_proj f32 result
        return io + qkv_f32 + qkv_m + scores + slab + out_f32

    # --- batch_tile: big enough to amortize ~0.35us/step overhead, small enough for VMEM,
    #     and guaranteeing >= 2 grid steps so both v7x TensorCores get work. ---
    max_bt = 1 if N < 2 else (N + 1) // 2      # ceil(N/2) => grid length >= 2
    if batch_tile is None:
        budget = max(vmem_limit - weight_bytes, per_step_bytes(1))
        fit_bt = max(1, int(budget // int(1.5 * per_step_bytes(1))))        # 1.5x fudge
        io_bt = max(1, (8 * 1024 * 1024) // max(1, T * F * in_itemsize))    # <= ~8 MiB x block
        batch_tile = min(max_bt, fit_bt, io_bt)
    batch_tile = int(max(1, min(batch_tile, N)))

    # --- Non-divisible N: pad up to a whole number of blocks (never shrink batch_tile to 1). ---
    grid_n = pl.cdiv(N, batch_tile)
    n_pad = grid_n * batch_tile
    x_in = x if n_pad == N else jnp.pad(x, ((0, n_pad - N), (0, 0), (0, 0)))

    cost = pl.CostEstimate(
        flops=int(N * (8 * T * F * F + 4 * T * T * F)),
        transcendentals=int(N * H * T * T),
        bytes_accessed=int(2 * N * T * F * in_itemsize + weight_bytes // 2),
    )

    kernel = partial(_mha_kernel, num_heads=H)

    out = pl.pallas_call(
        kernel,
        out_shape=jax.ShapeDtypeStruct((n_pad, T, F), x.dtype),
        grid_spec=pltpu.PrefetchScalarGridSpec(
            num_scalar_prefetch=0,
            grid=(grid_n,),
            in_specs=[
                pl.BlockSpec((batch_tile, T, F), lambda n: (n, 0, 0)),   # x
                pl.BlockSpec((F, 3 * F), lambda n: (0, 0)),              # fused QKV weight
                pl.BlockSpec((1, 3 * F), lambda n: (0, 0)),              # fused QKV bias
                pl.BlockSpec((F, F), lambda n: (0, 0)),                  # c_proj weight
                pl.BlockSpec((1, F), lambda n: (0, 0)),                  # c_proj bias
            ],
            out_specs=pl.BlockSpec((batch_tile, T, F), lambda n: (n, 0, 0)),
            scratch_shapes=[pltpu.VMEM((batch_tile, T, F), mdt)],        # head-output slab
        ),
        compiler_params=pltpu.CompilerParams(
            dimension_semantics=("parallel",),
            vmem_limit_bytes=vmem_limit),
        cost_estimate=cost,
    )(x_in, w_qkv, b_qkv, wp_m, bp_m)

    return out if n_pad == N else out[:N]


def _reference(x, wq, bq, wk, bk, wv, bv, wp, bp):
    """Pure-JAX reference mirroring the PyTorch forward exactly (f32)."""
    N, T, F = x.shape
    H, _, D = wq.shape
    scale = math.sqrt(D)
    outs = []
    for n in range(N):
        seq = x[n].astype(jnp.float32)
        heads = []
        for h in range(H):
            q = seq @ wq[h] + bq[h]
            k = seq @ wk[h] + bk[h]
            v = seq @ wv[h] + bv[h]
            a = jax.nn.softmax(q @ k.T / scale, axis=-1)
            heads.append(a @ v)
        concat = jnp.concatenate(heads, axis=-1)
        outs.append(concat @ wp + bp)
    return jnp.stack(outs, axis=0).astype(x.dtype)


if __name__ == "__main__":
    # Small shapes consistent with the module: batch=2, tokens=8, features=32, heads=4.
    N, T, F, H = 2, 8, 32, 4
    D = F // H

    key = jax.random.PRNGKey(0)
    keys = jax.random.split(key, 9)
    bound = 1.0 / math.sqrt(F)  # nn.Linear-style uniform init, deterministic

    x = jax.random.normal(keys[0], (N, T, F), dtype=jnp.float32)
    wq = jax.random.uniform(keys[1], (H, F, D), jnp.float32, -bound, bound)
    bq = jax.random.uniform(keys[2], (H, 1, D), jnp.float32, -bound, bound)
    wk = jax.random.uniform(keys[3], (H, F, D), jnp.float32, -bound, bound)
    bk = jax.random.uniform(keys[4], (H, 1, D), jnp.float32, -bound, bound)
    wv = jax.random.uniform(keys[5], (H, F, D), jnp.float32, -bound, bound)
    bv = jax.random.uniform(keys[6], (H, 1, D), jnp.float32, -bound, bound)
    wp = jax.random.uniform(keys[7], (F, F), jnp.float32, -bound, bound)
    bp = jax.random.uniform(keys[8], (1, F), jnp.float32, -bound, bound)

    ref = _reference(x, wq, bq, wk, bk, wv, bv, wp, bp)

    # Default path: bf16 MXU operands, f32 accumulation (relaxed tolerance vs f32 reference).
    out = multi_head_attention(x, wq, bq, wk, bk, wv, bv, wp, bp)
    out = jax.block_until_ready(out)
    assert out.shape == (N, T, F)
    assert jnp.allclose(out, ref, atol=2e-2, rtol=2e-2), "bf16-path mismatch vs reference"

    # Full-precision path (same kernel, f32 MXU operands) for a tighter check.
    out_f32 = multi_head_attention(x, wq, bq, wk, bk, wv, bv, wp, bp, mxu_dtype=jnp.float32)
    out_f32 = jax.block_until_ready(out_f32)
    assert jnp.allclose(out_f32, ref, atol=5e-3, rtol=5e-3), "f32-path mismatch vs reference"

    print("KERNEL_OK")
</pallas_src>

<mosaic_0001>
module attributes {stable_mosaic.version = 11 : i64} {
  func.func @_mha_kernel(%arg0: i32, %arg1: memref<1x8x32xf32, #tpu.memory_space<vmem>>, %arg2: memref<32x96xbf16, #tpu.memory_space<vmem>>, %arg3: memref<1x96xf32, #tpu.memory_space<vmem>>, %arg4: memref<32x32xbf16, #tpu.memory_space<vmem>>, %arg5: memref<1x32xf32, #tpu.memory_space<vmem>>, %arg6: memref<1x8x32xf32, #tpu.memory_space<vmem>>, %arg7: memref<1x8x32xbf16, #tpu.memory_space<vmem>>) attributes {dimension_semantics = [#tpu.dimension_semantics<parallel>], iteration_bounds = array<i64: 2>, scalar_prefetch = 0 : i64, scratch_operands = 1 : i64, tpu.core_type = #tpu.core_type<tc>, window_params = [{transform_indices = @transform_0, window_bounds = array<i64: 1, 8, 32>}, {pipeline_mode = #tpu.pipeline_mode<synchronous>, transform_indices = @transform_1, window_bounds = array<i64: 32, 96>}, {pipeline_mode = #tpu.pipeline_mode<synchronous>, transform_indices = @transform_2, window_bounds = array<i64: 1, 96>}, {pipeline_mode = #tpu.pipeline_mode<synchronous>, transform_indices = @transform_3, window_bounds = array<i64: 32, 32>}, {pipeline_mode = #tpu.pipeline_mode<synchronous>, transform_indices = @transform_4, window_bounds = array<i64: 1, 32>}, {transform_indices = @transform_5, window_bounds = array<i64: 1, 8, 32>}]} {
    %c0 = arith.constant 0 : index
    %c0_0 = arith.constant 0 : index
    %c0_1 = arith.constant 0 : index
    %0 = vector.load %arg1[%c0, %c0_0, %c0_1] : memref<1x8x32xf32, #tpu.memory_space<vmem>>, vector<1x8x32xf32>
    %1 = vector.shape_cast %0 : vector<1x8x32xf32> to vector<8x32xf32>
    %2 = arith.truncf %1 : vector<8x32xf32> to vector<8x32xbf16>
    %c0_2 = arith.constant 0 : index
    %c0_3 = arith.constant 0 : index
    %3 = vector.load %arg2[%c0_2, %c0_3] : memref<32x96xbf16, #tpu.memory_space<vmem>>, vector<32x96xbf16>
    %cst = arith.constant dense<0.000000e+00> : vector<8x96xf32>
    %4 = tpu.matmul %2, %3, %cst {dimension_numbers = #tpu.dot_dimension_numbers<[1], [0], [0], [1], [0, 0, 1, 1], [], []>} : vector<8x32xbf16>, vector<32x96xbf16>, vector<8x96xf32> -> vector<8x96xf32>
    %c0_4 = arith.constant 0 : index
    %c0_5 = arith.constant 0 : index
    %5 = vector.load %arg3[%c0_4, %c0_5] : memref<1x96xf32, #tpu.memory_space<vmem>>, vector<1x96xf32>
    %6 = vector.broadcast %5 : vector<1x96xf32> to vector<8x96xf32>
    %7 = arith.addf %4, %6 : vector<8x96xf32>
    %8 = vector.extract_strided_slice %7 {offsets = [0, 0], sizes = [8, 32], strides = [1, 1]} : vector<8x96xf32> to vector<8x32xf32>
    %9 = vector.shape_cast %8 : vector<8x32xf32> to vector<1x8x32xf32>
    %10 = arith.truncf %9 : vector<1x8x32xf32> to vector<1x8x32xbf16>
    %11 = vector.extract_strided_slice %7 {offsets = [0, 32], sizes = [8, 32], strides = [1, 1]} : vector<8x96xf32> to vector<8x32xf32>
    %12 = vector.shape_cast %11 : vector<8x32xf32> to vector<1x8x32xf32>
    %13 = arith.truncf %12 : vector<1x8x32xf32> to vector<1x8x32xbf16>
    %14 = vector.extract_strided_slice %7 {offsets = [0, 64], sizes = [8, 32], strides = [1, 1]} : vector<8x96xf32> to vector<8x32xf32>
    %15 = vector.shape_cast %14 : vector<8x32xf32> to vector<1x8x32xf32>
    %16 = arith.truncf %15 : vector<1x8x32xf32> to vector<1x8x32xbf16>
    %17 = vector.extract_strided_slice %10 {offsets = [0, 0, 0], sizes = [1, 8, 8], strides = [1, 1, 1]} : vector<1x8x32xbf16> to vector<1x8x8xbf16>
    %18 = vector.extract_strided_slice %13 {offsets = [0, 0, 0], sizes = [1, 8, 8], strides = [1, 1, 1]} : vector<1x8x32xbf16> to vector<1x8x8xbf16>
    %19 = vector.extract_strided_slice %16 {offsets = [0, 0, 0], sizes = [1, 8, 8], strides = [1, 1, 1]} : vector<1x8x32xbf16> to vector<1x8x8xbf16>
    %cst_6 = arith.constant dense<0.000000e+00> : vector<1x8x8xf32>
    %20 = tpu.matmul %17, %18, %cst_6 {dimension_numbers = #tpu.dot_dimension_numbers<[2], [2], [1], [1], [0, 0, 0, 1, 1, 1], [0], [0]>} : vector<1x8x8xbf16>, vector<1x8x8xbf16>, vector<1x8x8xf32> -> vector<1x8x8xf32>
    %cst_7 = arith.constant dense<0xFF800000> : vector<1x8xf32>
    %21 = vector.multi_reduction <maximumf>, %20, %cst_7 [2] : vector<1x8x8xf32> to vector<1x8xf32>
    %22 = vector.shape_cast %21 : vector<1x8xf32> to vector<1x8x1xf32>
    %23 = vector.broadcast %22 : vector<1x8x1xf32> to vector<1x8x8xf32>
    %24 = arith.subf %20, %23 : vector<1x8x8xf32>
    %25 = math.exp %24 : vector<1x8x8xf32>
    %cst_8 = arith.constant dense<0.000000e+00> : vector<1x8xf32>
    %26 = vector.multi_reduction <add>, %25, %cst_8 [2] : vector<1x8x8xf32> to vector<1x8xf32>
    %27 = vector.shape_cast %26 : vector<1x8xf32> to vector<1x8x1xf32>
    %28 = tpu.reciprocal %27 {approx = true} : vector<1x8x1xf32> -> vector<1x8x1xf32>
    %29 = vector.broadcast %28 : vector<1x8x1xf32> to vector<1x8x8xf32>
    %30 = arith.mulf %25, %29 : vector<1x8x8xf32>
    %31 = arith.truncf %30 : vector<1x8x8xf32> to vector<1x8x8xbf16>
    %cst_9 = arith.constant dense<0.000000e+00> : vector<1x8x8xf32>
    %32 = tpu.matmul %31, %19, %cst_9 {dimension_numbers = #tpu.dot_dimension_numbers<[2], [1], [1], [2], [0, 0, 0, 1, 1, 2], [0], [0]>} : vector<1x8x8xbf16>, vector<1x8x8xbf16>, vector<1x8x8xf32> -> vector<1x8x8xf32>
    %33 = arith.truncf %32 : vector<1x8x8xf32> to vector<1x8x8xbf16>
    %c0_10 = arith.constant 0 : index
    %c0_11 = arith.constant 0 : index
    %c0_12 = arith.constant 0 : index
    %34 = vector.load %arg7[%c0_10, %c0_11, %c0_12] : memref<1x8x32xbf16, #tpu.memory_space<vmem>>, vector<1x8x8xbf16>
    tpu.vector_store %arg7[%c0_10, %c0_11, %c0_12], %33 {strides = array<i32>} : memref<1x8x32xbf16, #tpu.memory_space<vmem>>, vector<1x8x8xbf16>,
    %35 = vector.extract_strided_slice %10 {offsets = [0, 0, 8], sizes = [1, 8, 8], strides = [1, 1, 1]} : vector<1x8x32xbf16> to vector<1x8x8xbf16>
    %36 = vector.extract_strided_slice %13 {offsets = [0, 0, 8], sizes = [1, 8, 8], strides = [1, 1, 1]} : vector<1x8x32xbf16> to vector<1x8x8xbf16>
    %37 = vector.extract_strided_slice %16 {offsets = [0, 0, 8], sizes = [1, 8, 8], strides = [1, 1, 1]} : vector<1x8x32xbf16> to vector<1x8x8xbf16>
    %cst_13 = arith.constant dense<0.000000e+00> : vector<1x8x8xf32>
    %38 = tpu.matmul %35, %36, %cst_13 {dimension_numbers = #tpu.dot_dimension_numbers<[2], [2], [1], [1], [0, 0, 0, 1, 1, 1], [0], [0]>} : vector<1x8x8xbf16>, vector<1x8x8xbf16>, vector<1x8x8xf32> -> vector<1x8x8xf32>
    %cst_14 = arith.constant dense<0xFF800000> : vector<1x8xf32>
    %39 = vector.multi_reduction <maximumf>, %38, %cst_14 [2] : vector<1x8x8xf32> to vector<1x8xf32>
    %40 = vector.shape_cast %39 : vector<1x8xf32> to vector<1x8x1xf32>
    %41 = vector.broadcast %40 : vector<1x8x1xf32> to vector<1x8x8xf32>
    %42 = arith.subf %38, %41 : vector<1x8x8xf32>
    %43 = math.exp %42 : vector<1x8x8xf32>
    %cst_15 = arith.constant dense<0.000000e+00> : vector<1x8xf32>
    %44 = vector.multi_reduction <add>, %43, %cst_15 [2] : vector<1x8x8xf32> to vector<1x8xf32>
    %45 = vector.shape_cast %44 : vector<1x8xf32> to vector<1x8x1xf32>
    %46 = tpu.reciprocal %45 {approx = true} : vector<1x8x1xf32> -> vector<1x8x1xf32>
    %47 = vector.broadcast %46 : vector<1x8x1xf32> to vector<1x8x8xf32>
    %48 = arith.mulf %43, %47 : vector<1x8x8xf32>
    %49 = arith.truncf %48 : vector<1x8x8xf32> to vector<1x8x8xbf16>
    %cst_16 = arith.constant dense<0.000000e+00> : vector<1x8x8xf32>
    %50 = tpu.matmul %49, %37, %cst_16 {dimension_numbers = #tpu.dot_dimension_numbers<[2], [1], [1], [2], [0, 0, 0, 1, 1, 2], [0], [0]>} : vector<1x8x8xbf16>, vector<1x8x8xbf16>, vector<1x8x8xf32> -> vector<1x8x8xf32>
    %51 = arith.truncf %50 : vector<1x8x8xf32> to vector<1x8x8xbf16>
    %c0_17 = arith.constant 0 : index
    %c0_18 = arith.constant 0 : index
    %c8 = arith.constant 8 : index
    %52 = vector.load %arg7[%c0_17, %c0_18, %c8] : memref<1x8x32xbf16, #tpu.memory_space<vmem>>, vector<1x8x8xbf16>
    tpu.vector_store %arg7[%c0_17, %c0_18, %c8], %51 {strides = array<i32>} : memref<1x8x32xbf16, #tpu.memory_space<vmem>>, vector<1x8x8xbf16>,
    %53 = vector.extract_strided_slice %10 {offsets = [0, 0, 16], sizes = [1, 8, 8], strides = [1, 1, 1]} : vector<1x8x32xbf16> to vector<1x8x8xbf16>
    %54 = vector.extract_strided_slice %13 {offsets = [0, 0, 16], sizes = [1, 8, 8], strides = [1, 1, 1]} : vector<1x8x32xbf16> to vector<1x8x8xbf16>
    %55 = vector.extract_strided_slice %16 {offsets = [0, 0, 16], sizes = [1, 8, 8], strides = [1, 1, 1]} : vector<1x8x32xbf16> to vector<1x8x8xbf16>
    %cst_19 = arith.constant dense<0.000000e+00> : vector<1x8x8xf32>
    %56 = tpu.matmul %53, %54, %cst_19 {dimension_numbers = #tpu.dot_dimension_numbers<[2], [2], [1], [1], [0, 0, 0, 1, 1, 1], [0], [0]>} : vector<1x8x8xbf16>, vector<1x8x8xbf16>, vector<1x8x8xf32> -> vector<1x8x8xf32>
    %cst_20 = arith.constant dense<0xFF800000> : vector<1x8xf32>
    %57 = vector.multi_reduction <maximumf>, %56, %cst_20 [2] : vector<1x8x8xf32> to vector<1x8xf32>
    %58 = vector.shape_cast %57 : vector<1x8xf32> to vector<1x8x1xf32>
    %59 = vector.broadcast %58 : vector<1x8x1xf32> to vector<1x8x8xf32>
    %60 = arith.subf %56, %59 : vector<1x8x8xf32>
    %61 = math.exp %60 : vector<1x8x8xf32>
    %cst_21 = arith.constant dense<0.000000e+00> : vector<1x8xf32>
    %62 = vector.multi_reduction <add>, %61, %cst_21 [2] : vector<1x8x8xf32> to vector<1x8xf32>
    %63 = vector.shape_cast %62 : vector<1x8xf32> to vector<1x8x1xf32>
    %64 = tpu.reciprocal %63 {approx = true} : vector<1x8x1xf32> -> vector<1x8x1xf32>
    %65 = vector.broadcast %64 : vector<1x8x1xf32> to vector<1x8x8xf32>
    %66 = arith.mulf %61, %65 : vector<1x8x8xf32>
    %67 = arith.truncf %66 : vector<1x8x8xf32> to vector<1x8x8xbf16>
    %cst_22 = arith.constant dense<0.000000e+00> : vector<1x8x8xf32>
    %68 = tpu.matmul %67, %55, %cst_22 {dimension_numbers = #tpu.dot_dimension_numbers<[2], [1], [1], [2], [0, 0, 0, 1, 1, 2], [0], [0]>} : vector<1x8x8xbf16>, vector<1x8x8xbf16>, vector<1x8x8xf32> -> vector<1x8x8xf32>
    %69 = arith.truncf %68 : vector<1x8x8xf32> to vector<1x8x8xbf16>
    %c0_23 = arith.constant 0 : index
    %c0_24 = arith.constant 0 : index
    %c16 = arith.constant 16 : index
    %70 = vector.load %arg7[%c0_23, %c0_24, %c16] : memref<1x8x32xbf16, #tpu.memory_space<vmem>>, vector<1x8x8xbf16>
    tpu.vector_store %arg7[%c0_23, %c0_24, %c16], %69 {strides = array<i32>} : memref<1x8x32xbf16, #tpu.memory_space<vmem>>, vector<1x8x8xbf16>,
    %71 = vector.extract_strided_slice %10 {offsets = [0, 0, 24], sizes = [1, 8, 8], strides = [1, 1, 1]} : vector<1x8x32xbf16> to vector<1x8x8xbf16>
    %72 = vector.extract_strided_slice %13 {offsets = [0, 0, 24], sizes = [1, 8, 8], strides = [1, 1, 1]} : vector<1x8x32xbf16> to vector<1x8x8xbf16>
    %73 = vector.extract_strided_slice %16 {offsets = [0, 0, 24], sizes = [1, 8, 8], strides = [1, 1, 1]} : vector<1x8x32xbf16> to vector<1x8x8xbf16>
    %cst_25 = arith.constant dense<0.000000e+00> : vector<1x8x8xf32>
    %74 = tpu.matmul %71, %72, %cst_25 {dimension_numbers = #tpu.dot_dimension_numbers<[2], [2], [1], [1], [0, 0, 0, 1, 1, 1], [0], [0]>} : vector<1x8x8xbf16>, vector<1x8x8xbf16>, vector<1x8x8xf32> -> vector<1x8x8xf32>
    %cst_26 = arith.constant dense<0xFF800000> : vector<1x8xf32>
    %75 = vector.multi_reduction <maximumf>, %74, %cst_26 [2] : vector<1x8x8xf32> to vector<1x8xf32>
    %76 = vector.shape_cast %75 : vector<1x8xf32> to vector<1x8x1xf32>
    %77 = vector.broadcast %76 : vector<1x8x1xf32> to vector<1x8x8xf32>
    %78 = arith.subf %74, %77 : vector<1x8x8xf32>
    %79 = math.exp %78 : vector<1x8x8xf32>
    %cst_27 = arith.constant dense<0.000000e+00> : vector<1x8xf32>
    %80 = vector.multi_reduction <add>, %79, %cst_27 [2] : vector<1x8x8xf32> to vector<1x8xf32>
    %81 = vector.shape_cast %80 : vector<1x8xf32> to vector<1x8x1xf32>
    %82 = tpu.reciprocal %81 {approx = true} : vector<1x8x1xf32> -> vector<1x8x1xf32>
    %83 = vector.broadcast %82 : vector<1x8x1xf32> to vector<1x8x8xf32>
    %84 = arith.mulf %79, %83 : vector<1x8x8xf32>
    %85 = arith.truncf %84 : vector<1x8x8xf32> to vector<1x8x8xbf16>
    %cst_28 = arith.constant dense<0.000000e+00> : vector<1x8x8xf32>
    %86 = tpu.matmul %85, %73, %cst_28 {dimension_numbers = #tpu.dot_dimension_numbers<[2], [1], [1], [2], [0, 0, 0, 1, 1, 2], [0], [0]>} : vector<1x8x8xbf16>, vector<1x8x8xbf16>, vector<1x8x8xf32> -> vector<1x8x8xf32>
    %87 = arith.truncf %86 : vector<1x8x8xf32> to vector<1x8x8xbf16>
    %c0_29 = arith.constant 0 : index
    %c0_30 = arith.constant 0 : index
    %c24 = arith.constant 24 : index
    %88 = vector.load %arg7[%c0_29, %c0_30, %c24] : memref<1x8x32xbf16, #tpu.memory_space<vmem>>, vector<1x8x8xbf16>
    tpu.vector_store %arg7[%c0_29, %c0_30, %c24], %87 {strides = array<i32>} : memref<1x8x32xbf16, #tpu.memory_space<vmem>>, vector<1x8x8xbf16>,
    %c0_31 = arith.constant 0 : index
    %c0_32 = arith.constant 0 : index
    %c0_33 = arith.constant 0 : index
    %89 = vector.load %arg7[%c0_31, %c0_32, %c0_33] : memref<1x8x32xbf16, #tpu.memory_space<vmem>>, vector<1x8x32xbf16>
    %90 = vector.shape_cast %89 : vector<1x8x32xbf16> to vector<8x32xbf16>
    %c0_34 = arith.constant 0 : index
    %c0_35 = arith.constant 0 : index
    %91 = vector.load %arg4[%c0_34, %c0_35] : memref<32x32xbf16, #tpu.memory_space<vmem>>, vector<32x32xbf16>
    %cst_36 = arith.constant dense<0.000000e+00> : vector<8x32xf32>
    %92 = tpu.matmul %90, %91, %cst_36 {dimension_numbers = #tpu.dot_dimension_numbers<[1], [0], [0], [1], [0, 0, 1, 1], [], []>} : vector<8x32xbf16>, vector<32x32xbf16>, vector<8x32xf32> -> vector<8x32xf32>
    %c0_37 = arith.constant 0 : index
    %c0_38 = arith.constant 0 : index
    %93 = vector.load %arg5[%c0_37, %c0_38] : memref<1x32xf32, #tpu.memory_space<vmem>>, vector<1x32xf32>
    %94 = vector.broadcast %93 : vector<1x32xf32> to vector<8x32xf32>
    %95 = arith.addf %92, %94 : vector<8x32xf32>
    %96 = vector.shape_cast %95 : vector<8x32xf32> to vector<1x8x32xf32>
    %c0_39 = arith.constant 0 : index
    %c0_40 = arith.constant 0 : index
    %c0_41 = arith.constant 0 : index
    %97 = vector.load %arg6[%c0_39, %c0_40, %c0_41] : memref<1x8x32xf32, #tpu.memory_space<vmem>>, vector<1x8x32xf32>
    tpu.vector_store %arg6[%c0_39, %c0_40, %c0_41], %96 {strides = array<i32>} : memref<1x8x32xf32, #tpu.memory_space<vmem>>, vector<1x8x32xf32>,
    return
  }
  func.func @transform_0(%arg0: i32) -> (i32, i32, i32) {
    %c0_i32 = arith.constant 0 : i32
    %c0_i32_0 = arith.constant 0 : i32
    %c0_i32_1 = arith.constant 0 : i32
    return %arg0, %c0_i32, %c0_i32_0 : i32, i32, i32
  }
  func.func @transform_1(%arg0: i32) -> (i32, i32) {
    %c0_i32 = arith.constant 0 : i32
    %c0_i32_0 = arith.constant 0 : i32
    %c0_i32_1 = arith.constant 0 : i32
    return %c0_i32, %c0_i32_0 : i32, i32
  }
  func.func @transform_2(%arg0: i32) -> (i32, i32) {
    %c0_i32 = arith.constant 0 : i32
    %c0_i32_0 = arith.constant 0 : i32
    %c0_i32_1 = arith.constant 0 : i32
    return %c0_i32, %c0_i32_0 : i32, i32
  }
  func.func @transform_3(%arg0: i32) -> (i32, i32) {
    %c0_i32 = arith.constant 0 : i32
    %c0_i32_0 = arith.constant 0 : i32
    %c0_i32_1 = arith.constant 0 : i32
    return %c0_i32, %c0_i32_0 : i32, i32
  }
  func.func @transform_4(%arg0: i32) -> (i32, i32) {
    %c0_i32 = arith.constant 0 : i32
    %c0_i32_0 = arith.constant 0 : i32
    %c0_i32_1 = arith.constant 0 : i32
    return %c0_i32, %c0_i32_0 : i32, i32
  }
  func.func @transform_5(%arg0: i32) -> (i32, i32, i32) {
    %c0_i32 = arith.constant 0 : i32
    %c0_i32_0 = arith.constant 0 : i32
    %c0_i32_1 = arith.constant 0 : i32
    return %arg0, %c0_i32, %c0_i32_0 : i32, i32, i32
  }
}

</mosaic_0001>

<llo_original>
// kernel: tpu_custom_call.1
$region0: #{tpu_custom_call.1}
  #allocation0 [shape = 'u32[]', space=smem, size = 0x4, offset = 0x4, fixed_abs, tag = 'smem constant byte address 0x4 - core index']
  #allocation1 [shape = 'u32[144,128]{1,0:T(1,128)}', space=vmem, size = 0x12000, scoped, tag = 'internal scratch']
  #allocation2 [shape = 'bf16[1,8,32]{2,1,0:T(8,128)(2,1)}', space=vmem, size = 0x800, scoped, tag = 'scratch operand']
  %s0 = inlined_call_operand.hbm [shape: f32[2,8,32], index: 0, kind: input, shape index: {}]
  %s1 = inlined_call_operand.hbm [shape: bf16[32,96], index: 1, kind: input, shape index: {}]
  %s2 = inlined_call_operand.vmem [shape: f32[1,96], index: 2, kind: input, shape index: {}]
  %s3 = inlined_call_operand.hbm [shape: bf16[32,32], index: 3, kind: input, shape index: {}]
  %s4 = inlined_call_operand.vmem [shape: f32[1,32], index: 4, kind: input, shape index: {}]
  %s5 = inlined_call_operand.hbm [shape: f32[2,8,32], index: 5, kind: output, shape index: {}]
  %s6 = sld [smem:[#allocation0]]
  $region65: #{tpu_custom_call.1} parent=0
    _
  %s8 = ssub.s32 1, %s6
  %s9 = scalar_select 0, %s8, %s6
  $region1: #{tpu_custom_call.1} parent=0
    #allocation3 [shape = 'u8[8192]{0}', space=vmem, size = 0x2000, scoped, tag = 'input window, operand 0']
    #allocation4 [shape = 's32[2]{0}', space=sflag, size = 0x8, scoped, tag = 'scoped memory for tpu_custom_call.1']
    #allocation5 [shape = 's32[2]{0}', space=sflag, size = 0x8, scoped, tag = 'scoped memory for tpu_custom_call.1']
    #allocation6 [shape = 'u8[8192]{0}', space=vmem, size = 0x2000, scoped, tag = 'input window, operand 1, single buffered']
    #allocation7 [shape = 's32[1]{0}', space=sflag, size = 0x4, scoped, tag = 'scoped memory for tpu_custom_call.1']
    #allocation8 [shape = 'u8[8192]{0}', space=vmem, size = 0x2000, scoped, tag = 'input window, operand 3, single buffered']
    #allocation9 [shape = 'u8[8192]{0}', space=vmem, size = 0x2000, scoped, tag = 'output window, operand 0']
    %10 = vsyncpa [#allocation4], 0
    %s11 = scalar_lea.sflag [#allocation4], 1
    %12 = vsyncpa %s11, 0
    %13 = vsyncpa [#allocation7], 0
    %14 = vsyncpa [#allocation5], 0
    %s15 = scalar_lea.sflag [#allocation5], 1
    %16 = vsyncpa %s15, 0
    loop: start=0, step=1, limit=4
    $region2: #{tpu_custom_call.1} parent=1 // loop_pre_header
      _
    $region3: #{tpu_custom_call.1} parent=1 // loop_header
      %s18 = sphi 0, %s22
      %p19 = scmp.ge.s32.totalorder %s18, 4
      %s28 = sphi 0, %s30
      %s31 = sphi 0, %s28
      %s32 = sphi 0, %s31
      %s48 = sphi 0, %s32
      %s52 = sphi 0, %s52
      %s54 = sphi 0, %s52
      %s55 = sphi 0, %s54
      %s69 = sphi 0, %s55
      %s73 = sphi 0, %s73
      %s75 = sphi 0, %s73
      %s76 = sphi 0, %s75
      %s90 = sphi 0, %s76
      %s94 = sphi 0, %s94
      %s96 = sphi 0, %s94
      %s97 = sphi 0, %s96
      %s111 = sphi 0, %s97
      %s115 = sphi 0, %s115
      %s117 = sphi 0, %s115
      %s118 = sphi 0, %s117
      %s132 = sphi 0, %s118
      %s138 = sphi 0, %s140
      %s141 = sphi 0, %s138
      %s142 = sphi 0, %s141
      %s158 = sphi 0, %s142
    $region4: #{tpu_custom_call.1} parent=1 // loop_header_branch
      %21 = sbr.rel (%p19) target = $region8
    $region5: #{tpu_custom_call.1} parent=1 // loop_body
      %s23 = ssub.s32 %s18, 1
      %s24 = ssub.s32 %s18, 2
      %s25 = sadd.s32 %s18, 1
      %s26 = ssub.s32 %s18, %s25
      %p27 = scmp.eq.s32.totalorder %s26, 0
      %s29 = sadd.s32 %s28, 1
      %s30 = scalar_select %p27, %s28, %s29
      %p33 = pneg %p27
      %p34 = scmp.eq.s32.totalorder %s18, 1
      %p35 = por %p33, %p34
      %p36 = scmp.ne.s32.totalorder %s28, %s31
      %p37 = scmp.eq.s32.totalorder %s18, 0
      %p38 = por %p36, %p37
      %p39 = scmp.ne.s32.totalorder %s28, %s31
      %p40 = scmp.eq.s32.totalorder %s23, 1
      %p41 = por %p39, %p40
      %p42 = scmp.ne.s32.totalorder %s31, %s32
      %p43 = scmp.eq.s32.totalorder %s23, 0
      %p44 = por %p42, %p43
      %p45 = scmp.ne.s32.totalorder %s31, %s32
      %p46 = scmp.eq.s32.totalorder %s24, 1
      %p47 = por %p45, %p46
      %p49 = scmp.ne.s32.totalorder %s32, %s48
      %p50 = scmp.eq.s32.totalorder %s24, 0
      %p51 = por %p49, %p50
      %s53 = sadd.s32 %s52, 1
      %p56 = scmp.eq.s32.totalorder %s18, 1
      %p57 = scmp.ne.s32.totalorder %s52, %s54
      %p58 = scmp.eq.s32.totalorder %s18, 0
      %p59 = por %p57, %p58
      %p60 = scmp.ne.s32.totalorder %s52, %s54
      %p61 = scmp.eq.s32.totalorder %s23, 1
      %p62 = por %p60, %p61
      %p63 = scmp.ne.s32.totalorder %s54, %s55
      %p64 = scmp.eq.s32.totalorder %s23, 0
      %p65 = por %p63, %p64
      %p66 = scmp.ne.s32.totalorder %s54, %s55
      %p67 = scmp.eq.s32.totalorder %s24, 1
      %p68 = por %p66, %p67
      %p70 = scmp.ne.s32.totalorder %s55, %s69
      %p71 = scmp.eq.s32.totalorder %s24, 0
      %p72 = por %p70, %p71
      %s74 = sadd.s32 %s73, 1
      %p77 = scmp.eq.s32.totalorder %s18, 1
      %p78 = scmp.ne.s32.totalorder %s73, %s75
      %p79 = scmp.eq.s32.totalorder %s18, 0
      %p80 = por %p78, %p79
      %p81 = scmp.ne.s32.totalorder %s73, %s75
      %p82 = scmp.eq.s32.totalorder %s23, 1
      %p83 = por %p81, %p82
      %p84 = scmp.ne.s32.totalorder %s75, %s76
      %p85 = scmp.eq.s32.totalorder %s23, 0
      %p86 = por %p84, %p85
      %p87 = scmp.ne.s32.totalorder %s75, %s76
      %p88 = scmp.eq.s32.totalorder %s24, 1
      %p89 = por %p87, %p88
      %p91 = scmp.ne.s32.totalorder %s76, %s90
      %p92 = scmp.eq.s32.totalorder %s24, 0
      %p93 = por %p91, %p92
      %s95 = sadd.s32 %s94, 1
      %p98 = scmp.eq.s32.totalorder %s18, 1
      %p99 = scmp.ne.s32.totalorder %s94, %s96
      %p100 = scmp.eq.s32.totalorder %s18, 0
      %p101 = por %p99, %p100
      %p102 = scmp.ne.s32.totalorder %s94, %s96
      %p103 = scmp.eq.s32.totalorder %s23, 1
      %p104 = por %p102, %p103
      %p105 = scmp.ne.s32.totalorder %s96, %s97
      %p106 = scmp.eq.s32.totalorder %s23, 0
      %p107 = por %p105, %p106
      %p108 = scmp.ne.s32.totalorder %s96, %s97
      %p109 = scmp.eq.s32.totalorder %s24, 1
      %p110 = por %p108, %p109
      %p112 = scmp.ne.s32.totalorder %s97, %s111
      %p113 = scmp.eq.s32.totalorder %s24, 0
      %p114 = por %p112, %p113
      %s116 = sadd.s32 %s115, 1
      %p119 = scmp.eq.s32.totalorder %s18, 1
      %p120 = scmp.ne.s32.totalorder %s115, %s117
      %p121 = scmp.eq.s32.totalorder %s18, 0
      %p122 = por %p120, %p121
      %p123 = scmp.ne.s32.totalorder %s115, %s117
      %p124 = scmp.eq.s32.totalorder %s23, 1
      %p125 = por %p123, %p124
      %p126 = scmp.ne.s32.totalorder %s117, %s118
      %p127 = scmp.eq.s32.totalorder %s23, 0
      %p128 = por %p126, %p127
      %p129 = scmp.ne.s32.totalorder %s117, %s118
      %p130 = scmp.eq.s32.totalorder %s24, 1
      %p131 = por %p129, %p130
      %p133 = scmp.ne.s32.totalorder %s118, %s132
      %p134 = scmp.eq.s32.totalorder %s24, 0
      %p135 = por %p133, %p134
      %s136 = ssub.s32 %s18, %s25
      %p137 = scmp.eq.s32.totalorder %s136, 0
      %s139 = sadd.s32 %s138, 1
      %s140 = scalar_select %p137, %s138, %s139
      %p143 = pneg %p137
      %p144 = scmp.eq.s32.totalorder %s18, 1
      %p145 = por %p143, %p144
      %p146 = scmp.ne.s32.totalorder %s138, %s141
      %p147 = scmp.eq.s32.totalorder %s18, 0
      %p148 = por %p146, %p147
      %p149 = scmp.ne.s32.totalorder %s138, %s141
      %p150 = scmp.eq.s32.totalorder %s23, 1
      %p151 = por %p149, %p150
      %p152 = scmp.ne.s32.totalorder %s141, %s142
      %p153 = scmp.eq.s32.totalorder %s23, 0
      %p154 = por %p152, %p153
      %p155 = scmp.ne.s32.totalorder %s141, %s142
      %p156 = scmp.eq.s32.totalorder %s24, 1
      %p157 = por %p155, %p156
      %p159 = scmp.ne.s32.totalorder %s142, %s158
      %p160 = scmp.eq.s32.totalorder %s24, 0
      %p161 = por %p159, %p160
      %p162 = scmp.le.s32.totalorder 1, %s18
      %p163 = scmp.lt.s32.totalorder %s18, 3
      %p164 = pnand %p162, %p163
      %p165 = pneg %p164
      // Predicated region
      $region9: #{tpu_custom_call.1} parent=5 // pred_check
        _
      $region10: #{tpu_custom_call.1} parent=5 // pred_check_branch
        %167 = sbr.rel (%p164) target = $region12
      $region11: #{tpu_custom_call.1} parent=5 // pred_region
        %s168 = ssub.s32 %s18, 1
        // Predicated region
        $region13: #{tpu_custom_call.1} parent=11 // pred_check
          %p169 = pneg %p65
        $region14: #{tpu_custom_call.1} parent=11 // pred_check_branch
          %171 = sbr.rel (%p169) target = $region16
        $region15: #{tpu_custom_call.1} parent=11 // pred_region
          %s173 = ssub.s32 256, 256
          %174 = vsyncadd [#allocation7], %s173
          %s175 = sshll.u32 [#allocation6], 4
          %s176 = int_to_ptr.vmem [resolvable:$true] %s175
          %181 = dma.hbm_to_vmem [thread:$0]  %s1, 256, %s176, [#allocation7], 64, 64, 4
        $region16: #{tpu_custom_call.1} parent=11 // pred_fallthru
          _
        // Predicated region
        $region17: #{tpu_custom_call.1} parent=11 // pred_check
          %p182 = pneg %p86
        $region18: #{tpu_custom_call.1} parent=11 // pred_check_branch
          %184 = sbr.rel (%p182) target = $region20
        $region19: #{tpu_custom_call.1} parent=11 // pred_region
          _
        $region20: #{tpu_custom_call.1} parent=11 // pred_fallthru
          _
        // Predicated region
        $region21: #{tpu_custom_call.1} parent=11 // pred_check
          %p185 = pneg %p107
        $region22: #{tpu_custom_call.1} parent=11 // pred_check_branch
          %187 = sbr.rel (%p185) target = $region24
        $region23: #{tpu_custom_call.1} parent=11 // pred_region
          %s189 = ssub.s32 256, 256
          %190 = vsyncadd [#allocation7], %s189
          %s191 = sshll.u32 [#allocation8], 4
          %s192 = int_to_ptr.vmem [resolvable:$true] %s191
          %197 = dma.hbm_to_vmem [thread:$0]  %s3, 256, %s192, [#allocation7], 64, 64, 4
        $region24: #{tpu_custom_call.1} parent=11 // pred_fallthru
          _
        // Predicated region
        $region25: #{tpu_custom_call.1} parent=11 // pred_check
          %p198 = pneg %p128
        $region26: #{tpu_custom_call.1} parent=11 // pred_check_branch
          %200 = sbr.rel (%p198) target = $region28
        $region27: #{tpu_custom_call.1} parent=11 // pred_region
          _
        $region28: #{tpu_custom_call.1} parent=11 // pred_fallthru
          _
      $region12: #{tpu_custom_call.1} parent=5 // pred_fallthru
        _
      %p201 = scmp.lt.s32.totalorder %s18, 2
      // Predicated region
      $region29: #{tpu_custom_call.1} parent=5 // pred_check
        %p202 = pneg %p201
      $region30: #{tpu_custom_call.1} parent=5 // pred_check_branch
        %204 = sbr.rel (%p202) target = $region32
      $region31: #{tpu_custom_call.1} parent=5 // pred_region
        // Predicated region
        $region33: #{tpu_custom_call.1} parent=31 // pred_check
          %p205 = pneg %p38
        $region34: #{tpu_custom_call.1} parent=31 // pred_check_branch
          %207 = sbr.rel (%p205) target = $region36
        $region35: #{tpu_custom_call.1} parent=31 // pred_region
          %s208 = sand.u32 %s28, 1
          %s209 = scalar_lea.sflag [#allocation4], %s208
          %s210 = sand.u32 %s28, 1
          %s211 = smul.addr %s210, 8
          %s212 = scalar_lea.vmem [#allocation3], %s211
          %s214 = ssub.s32 128, 128
          %215 = vsyncadd %s209, %s214
          %s216 = smul.addr %s18, 128
          %s217 = scalar_lea.hbm %s0, %s216
          %s219 = sshll.u32 %s212, 4
          %s220 = int_to_ptr.vmem [resolvable:$true] %s219
          %222 = dma.hbm_to_vmem [thread:$0]  %s217, 128, %s220, %s209
        $region36: #{tpu_custom_call.1} parent=31 // pred_fallthru
          _
      $region32: #{tpu_custom_call.1} parent=5 // pred_fallthru
        _
      %p223 = scmp.le.s32.totalorder 1, %s18
      %p224 = scmp.lt.s32.totalorder %s18, 3
      %p225 = pnand %p223, %p224
      %p226 = pneg %p225
      // Predicated region
      $region37: #{tpu_custom_call.1} parent=5 // pred_check
        _
      $region38: #{tpu_custom_call.1} parent=5 // pred_check_branch
        %228 = sbr.rel (%p225) target = $region40
      $region39: #{tpu_custom_call.1} parent=5 // pred_region
        %s229 = ssub.s32 %s18, 1
        %s230 = sand.u32 %s31, 1
        %s231 = scalar_lea.sflag [#allocation4], %s230
        %s232 = sand.u32 %s31, 1
        %s233 = smul.addr %s232, 8
        %s234 = scalar_lea.vmem [#allocation3], %s233
        // Predicated region
        $region41: #{tpu_custom_call.1} parent=39 // pred_check
          %p235 = pneg %p44
        $region42: #{tpu_custom_call.1} parent=39 // pred_check_branch
          %237 = sbr.rel (%p235) target = $region44
        $region43: #{tpu_custom_call.1} parent=39 // pred_region
          %238 = dma.done %s231, 128
        $region44: #{tpu_custom_call.1} parent=39 // pred_fallthru
          _
        // Predicated region
        $region45: #{tpu_custom_call.1} parent=39 // pred_check
          %p239 = pneg %p65
        $region46: #{tpu_custom_call.1} parent=39 // pred_check_branch
          %241 = sbr.rel (%p239) target = $region48
        $region47: #{tpu_custom_call.1} parent=39 // pred_region
          %242 = dma.done [#allocation7], 256
        $region48: #{tpu_custom_call.1} parent=39 // pred_fallthru
          _
        // Predicated region
        $region49: #{tpu_custom_call.1} parent=39 // pred_check
          %p243 = pneg %p107
        $region50: #{tpu_custom_call.1} parent=39 // pred_check_branch
          %245 = sbr.rel (%p243) target = $region52
        $region51: #{tpu_custom_call.1} parent=39 // pred_region
          %246 = dma.done [#allocation7], 256
        $region52: #{tpu_custom_call.1} parent=39 // pred_fallthru
          _
        %s247 = sand.u32 %s31, 1
        %s248 = scalar_lea.sflag [#allocation4], %s247
        %s249 = sand.u32 %s31, 1
        %s250 = smul.addr %s249, 8
        %s251 = scalar_lea.vmem [#allocation3], %s250
        %p252 = pneg %p44
        %p253 = pneg %p41
        %p254 = pneg %p65
        %p255 = pneg %p62
        %p256 = pneg %p86
        %p257 = pneg %p83
        %p258 = pneg %p107
        %p259 = pneg %p104
        %p260 = pneg %p128
        %p261 = pneg %p125
        %p262 = pneg %p154
        %p263 = pneg %p151
        %s264 = sand.u32 %s141, 1
        %s265 = scalar_lea.sflag [#allocation5], %s264
        %s266 = sand.u32 %s141, 1
        %s267 = smul.addr %s266, 8
        %s268 = scalar_lea.vmem [#allocation9], %s267
        %v270 = vld [vmem:[%s234] sm:$0xff]
        %v271 = vpack.c.bf16 %v270, %v270
        %v272 = vld [vmem:[#allocation6] sm:$0xf]
        %v273 = vld [vmem:[#allocation6 + $0x4] sm:$0xf]
        %v274 = vld [vmem:[#allocation6 + $0x8] sm:$0xf]
        %v275 = vld [vmem:[#allocation6 + $0xc] sm:$0xf]
        %v276 = vld [vmem:[%s2] sm:$0x1]
        %v278 = vlaneseq
        %v279 = vshrl.u32 %v278, 7
        %v280 = vsub.s32 0, %v279
        %v281 = vrot.slane %v276, %v280
        %v287 = vunpack.c.l.b16 %v272
        %v288 = vunpack.c.l.b16 %v273
        %v289 = vunpack.c.l.b16 %v274
        %v290 = vunpack.c.l.b16 %v275
        %v291 = vpack.c.b16 %v288, %v287
        %v292 = vpack.c.b16 %v290, %v289
        %vm295 = vcmask 261120
        %v297 = vsel %vm295, %v271, 0
        %299 = vmatprep.subr.bf16.mxu0 0
        %300 = vmatpush1.bf16.msra.mxu0 0
        %301 = vmatprep.subr.bf16.mxu0 0
        %302 = vmatpush1.bf16.msra.mxu0 0
        %303 = vmatprep.subr.bf16.mxu0 0
        %304 = vmatpush1.bf16.msra.mxu0 0
        %305 = vmatprep.subr.bf16.mxu0 0
        %306 = vmatpush1.bf16.msra.mxu0 0
        %307 = vmatprep.subr.bf16.mxu0 0
        %308 = vmatpush1.bf16.msra.mxu0 0
        %309 = vmatprep.subr.bf16.mxu0 0
        %310 = vmatpush1.bf16.msra.mxu0 0
        %311 = vmatprep.subr.bf16.mxu0 0
        %312 = vmatpush1.bf16.msra.mxu0 %v292
        %313 = vmatprep.subr.bf16.mxu0 0
        %314 = vmatpush1.bf16.msra.mxu0 %v291
        %315 = vmatprep.subr.bf16.mxu0 0
        %316 = vmatpush2.bf16.msra.mxu0 0
        %317 = vmatprep.subr.bf16.mxu0 0
        %318 = vmatpush2.bf16.msra.mxu0 0
        %319 = vmatprep.subr.bf16.mxu0 0
        %320 = vmatpush2.bf16.msra.mxu0 0
        %321 = vmatprep.subr.bf16.mxu0 0
        %322 = vmatpush2.bf16.msra.mxu0 0
        %323 = vmatprep.subr.bf16.mxu0 0
        %324 = vmatpush2.bf16.msra.mxu0 0
        %325 = vmatprep.subr.bf16.mxu0 0
        %326 = vmatpush2.bf16.msra.mxu0 0
        %327 = vmatprep.subr.bf16.mxu0 0
        %328 = vmatpush2.bf16.msra.mxu0 0
        %329 = vmatprep.subr.bf16.mxu0 0
        %330 = vmatpush2.bf16.msra.mxu0 0
        %331 = vmatprep.mubr.bf16.mxu0 0
        %332 = vmatmul.mubr.bf16.gmra.mxu0 %v297
        %v333 = vpop.f32.mrf.mxu0
        %v334 = vadd.f32 %v281, %v333
        %v335 = vpop.f32.mrf.mxu0
        %v336 = vpop.f32.mrf.mxu0
        %v337 = vpop.f32.mrf.mxu0
        %338 = vdwg.mxu0
        %v339 = vpack.c.bf16 %v334, %v334
        %341 = vrot.lane.b32.xlu0 %v339, 96
        %v342 = vpop.permute.xlu0 %341
        %vm343 = vcmask 64512
        %v345 = vsel %vm343, %v339, 0
        %v348 = vsel %vm343, %v342, 0
        %350 = vmatprep.subr.bf16.mxu0 0
        %351 = vmatpush1.bf16.xpose.msra.mxu0 0
        %352 = vmatprep.subr.bf16.mxu0 0
        %353 = vmatpush1.bf16.xpose.msra.mxu0 0
        %354 = vmatprep.subr.bf16.mxu0 0
        %355 = vmatpush1.bf16.xpose.msra.mxu0 0
        %356 = vmatprep.subr.bf16.mxu0 0
        %357 = vmatpush1.bf16.xpose.msra.mxu0 0
        %358 = vmatprep.subr.bf16.mxu0 0
        %359 = vmatpush1.bf16.xpose.msra.mxu0 0
        %360 = vmatprep.subr.bf16.mxu0 0
        %361 = vmatpush1.bf16.xpose.msra.mxu0 0
        %362 = vmatprep.subr.bf16.mxu0 0
        %363 = vmatpush1.bf16.xpose.msra.mxu0 0
        %364 = vmatprep.subr.bf16.mxu0 0
        %365 = vmatpush1.bf16.xpose.msra.mxu0 %v348
        %366 = vmatprep.subr.bf16.mxu0 0
        %367 = vmatpush2.bf16.xpose.msra.mxu0 0
        %368 = vmatprep.subr.bf16.mxu0 0
        %369 = vmatpush2.bf16.xpose.msra.mxu0 0
        %370 = vmatprep.subr.bf16.mxu0 0
        %371 = vmatpush2.bf16.xpose.msra.mxu0 0
        %372 = vmatprep.subr.bf16.mxu0 0
        %373 = vmatpush2.bf16.xpose.msra.mxu0 0
        %374 = vmatprep.subr.bf16.mxu0 0
        %375 = vmatpush2.bf16.xpose.msra.mxu0 0
        %376 = vmatprep.subr.bf16.mxu0 0
        %377 = vmatpush2.bf16.xpose.msra.mxu0 0
        %378 = vmatprep.subr.bf16.mxu0 0
        %379 = vmatpush2.bf16.xpose.msra.mxu0 0
        %380 = vmatprep.subr.bf16.mxu0 0
        %381 = vmatpush2.bf16.xpose.msra.mxu0 0
        %382 = vmatprep.mubr.bf16.mxu0 0
        %383 = vmatmul.mubr.bf16.gmra.mxu0 %v345
        %v384 = vpop.f32.mrf.mxu0
        %v385 = vadd.f32 0.0, %v384
        %v386 = vpop.f32.mrf.mxu0
        %v387 = vpop.f32.mrf.mxu0
        %v388 = vpop.f32.mrf.mxu0
        %389 = vdwg.mxu0
        %v390 = vsel %vm343, %v385, -inf
        %391 = vmax.xlane.f32.xlu0 %v390
        %v392 = vpop.xlane.xlu0 %391
        %v393 = vsub.f32 %v385, %v392
        %v394 = vmul.f32 %v393, 1.442695
        %v395 = vpow.pop %v394
        %v396 = vsel %vm343, %v395, 0.0
        %397 = vadd.xlane.f32.xlu0 %v396
        %v398 = vpop.xlane.xlu0 %397
        %v399 = vrcp.pop %v398
        %v400 = vmul.f32 %v395, %v399
        %v401 = vpack.c.bf16 %v400, %v400
        %402 = vrot.lane.b32.xlu0 %v339, 64
        %v403 = vpop.permute.xlu0 %402
        %v405 = vsel %vm343, %v401, 0
        %vm407 = vcmask 1043456
        %v409 = vsel %vm407, %v403, 0
        %411 = vmatprep.subr.bf16.mxu0 0
        %412 = vmatpush1.bf16.msra.mxu0 0
        %413 = vmatprep.subr.bf16.mxu0 0
        %414 = vmatpush1.bf16.msra.mxu0 0
        %415 = vmatprep.subr.bf16.mxu0 0
        %416 = vmatpush1.bf16.msra.mxu0 0
        %417 = vmatprep.subr.bf16.mxu0 0
        %418 = vmatpush1.bf16.msra.mxu0 0
        %419 = vmatprep.subr.bf16.mxu0 0
        %420 = vmatpush1.bf16.msra.mxu0 0
        %421 = vmatprep.subr.bf16.mxu0 0
        %422 = vmatpush1.bf16.msra.mxu0 0
        %423 = vmatprep.subr.bf16.mxu0 0
        %424 = vmatpush1.bf16.msra.mxu0 0
        %425 = vmatprep.subr.bf16.mxu0 0
        %426 = vmatpush1.bf16.msra.mxu0 %v409
        %427 = vmatprep.subr.bf16.mxu0 0
        %428 = vmatpush2.bf16.msra.mxu0 0
        %429 = vmatprep.subr.bf16.mxu0 0
        %430 = vmatpush2.bf16.msra.mxu0 0
        %431 = vmatprep.subr.bf16.mxu0 0
        %432 = vmatpush2.bf16.msra.mxu0 0
        %433 = vmatprep.subr.bf16.mxu0 0
        %434 = vmatpush2.bf16.msra.mxu0 0
        %435 = vmatprep.subr.bf16.mxu0 0
        %436 = vmatpush2.bf16.msra.mxu0 0
        %437 = vmatprep.subr.bf16.mxu0 0
        %438 = vmatpush2.bf16.msra.mxu0 0
        %439 = vmatprep.subr.bf16.mxu0 0
        %440 = vmatpush2.bf16.msra.mxu0 0
        %441 = vmatprep.subr.bf16.mxu0 0
        %442 = vmatpush2.bf16.msra.mxu0 0
        %443 = vmatprep.mubr.bf16.mxu0 0
        %444 = vmatmul.mubr.bf16.gmra.mxu0 %v405
        %v445 = vpop.f32.mrf.mxu0
        %v446 = vadd.f32 0.0, %v445
        %v447 = vpop.f32.mrf.mxu0
        %v448 = vpop.f32.mrf.mxu0
        %v449 = vpop.f32.mrf.mxu0
        %450 = vdwg.mxu0
        %v451 = vpack.c.bf16 %v446, %v446
        %vm452 = vcmask 60416
        %453 = vst.msk [vmem:[#allocation2] sm:$0xf] %vm452, %v451
        %454 = vrot.lane.b32.xlu0 %v339, 120
        %v455 = vpop.permute.xlu0 %454
        %456 = vrot.lane.b32.xlu0 %v339, 88
        %v457 = vpop.permute.xlu0 %456
        %v459 = vsel %vm343, %v455, 0
        %v462 = vsel %vm343, %v457, 0
        %464 = vmatprep.subr.bf16.mxu0 0
        %465 = vmatpush1.bf16.xpose.msra.mxu0 0
        %466 = vmatprep.subr.bf16.mxu0 0
        %467 = vmatpush1.bf16.xpose.msra.mxu0 0
        %468 = vmatprep.subr.bf16.mxu0 0
        %469 = vmatpush1.bf16.xpose.msra.mxu0 0
        %470 = vmatprep.subr.bf16.mxu0 0
        %471 = vmatpush1.bf16.xpose.msra.mxu0 0
        %472 = vmatprep.subr.bf16.mxu0 0
        %473 = vmatpush1.bf16.xpose.msra.mxu0 0
        %474 = vmatprep.subr.bf16.mxu0 0
        %475 = vmatpush1.bf16.xpose.msra.mxu0 0
        %476 = vmatprep.subr.bf16.mxu0 0
        %477 = vmatpush1.bf16.xpose.msra.mxu0 0
        %478 = vmatprep.subr.bf16.mxu0 0
        %479 = vmatpush1.bf16.xpose.msra.mxu0 %v462
        %480 = vmatprep.subr.bf16.mxu0 0
        %481 = vmatpush2.bf16.xpose.msra.mxu0 0
        %482 = vmatprep.subr.bf16.mxu0 0
        %483 = vmatpush2.bf16.xpose.msra.mxu0 0
        %484 = vmatprep.subr.bf16.mxu0 0
        %485 = vmatpush2.bf16.xpose.msra.mxu0 0
        %486 = vmatprep.subr.bf16.mxu0 0
        %487 = vmatpush2.bf16.xpose.msra.mxu0 0
        %488 = vmatprep.subr.bf16.mxu0 0
        %489 = vmatpush2.bf16.xpose.msra.mxu0 0
        %490 = vmatprep.subr.bf16.mxu0 0
        %491 = vmatpush2.bf16.xpose.msra.mxu0 0
        %492 = vmatprep.subr.bf16.mxu0 0
        %493 = vmatpush2.bf16.xpose.msra.mxu0 0
        %494 = vmatprep.subr.bf16.mxu0 0
        %495 = vmatpush2.bf16.xpose.msra.mxu0 0
        %496 = vmatprep.mubr.bf16.mxu0 0
        %497 = vmatmul.mubr.bf16.gmra.mxu0 %v459
        %v498 = vpop.f32.mrf.mxu0
        %v499 = vadd.f32 0.0, %v498
        %v500 = vpop.f32.mrf.mxu0
        %v501 = vpop.f32.mrf.mxu0
        %v502 = vpop.f32.mrf.mxu0
        %503 = vdwg.mxu0
        %v504 = vsel %vm343, %v499, -inf
        %505 = vmax.xlane.f32.xlu0 %v504
        %v506 = vpop.xlane.xlu0 %505
        %v507 = vsub.f32 %v499, %v506
        %v508 = vmul.f32 %v507, 1.442695
        %v509 = vpow.pop %v508
        %v510 = vsel %vm343, %v509, 0.0
        %511 = vadd.xlane.f32.xlu0 %v510
        %v512 = vpop.xlane.xlu0 %511
        %v513 = vrcp.pop %v512
        %v514 = vmul.f32 %v509, %v513
        %v515 = vpack.c.bf16 %v514, %v514
        %516 = vrot.lane.b32.xlu0 %v339, 56
        %v517 = vpop.permute.xlu0 %516
        %v519 = vsel %vm343, %v515, 0
        %v522 = vsel %vm407, %v517, 0
        %524 = vmatprep.subr.bf16.mxu0 0
        %525 = vmatpush1.bf16.msra.mxu0 0
        %526 = vmatprep.subr.bf16.mxu0 0
        %527 = vmatpush1.bf16.msra.mxu0 0
        %528 = vmatprep.subr.bf16.mxu0 0
        %529 = vmatpush1.bf16.msra.mxu0 0
        %530 = vmatprep.subr.bf16.mxu0 0
        %531 = vmatpush1.bf16.msra.mxu0 0
        %532 = vmatprep.subr.bf16.mxu0 0
        %533 = vmatpush1.bf16.msra.mxu0 0
        %534 = vmatprep.subr.bf16.mxu0 0
        %535 = vmatpush1.bf16.msra.mxu0 0
        %536 = vmatprep.subr.bf16.mxu0 0
        %537 = vmatpush1.bf16.msra.mxu0 0
        %538 = vmatprep.subr.bf16.mxu0 0
        %539 = vmatpush1.bf16.msra.mxu0 %v522
        %540 = vmatprep.subr.bf16.mxu0 0
        %541 = vmatpush2.bf16.msra.mxu0 0
        %542 = vmatprep.subr.bf16.mxu0 0
        %543 = vmatpush2.bf16.msra.mxu0 0
        %544 = vmatprep.subr.bf16.mxu0 0
        %545 = vmatpush2.bf16.msra.mxu0 0
        %546 = vmatprep.subr.bf16.mxu0 0
        %547 = vmatpush2.bf16.msra.mxu0 0
        %548 = vmatprep.subr.bf16.mxu0 0
        %549 = vmatpush2.bf16.msra.mxu0 0
        %550 = vmatprep.subr.bf16.mxu0 0
        %551 = vmatpush2.bf16.msra.mxu0 0
        %552 = vmatprep.subr.bf16.mxu0 0
        %553 = vmatpush2.bf16.msra.mxu0 0
        %554 = vmatprep.subr.bf16.mxu0 0
        %555 = vmatpush2.bf16.msra.mxu0 0
        %556 = vmatprep.mubr.bf16.mxu0 0
        %557 = vmatmul.mubr.bf16.gmra.mxu0 %v519
        %v558 = vpop.f32.mrf.mxu0
        %v559 = vadd.f32 0.0, %v558
        %v560 = vpop.f32.mrf.mxu0
        %v561 = vpop.f32.mrf.mxu0
        %v562 = vpop.f32.mrf.mxu0
        %563 = vdwg.mxu0
        %v564 = vpack.c.bf16 %v559, %v559
        %v566 = vunpack.c.l.b16 %v564
        %v567 = vpack.c.b16 %v566, %v566
        %568 = vrot.lane.b32.xlu0 %v567, 8
        %v569 = vpop.permute.xlu0 %568
        %vm571 = vcmask 126016
        %572 = vst.msk [vmem:[#allocation2] sm:$0xf] %vm571, %v569
        %573 = vrot.lane.b32.xlu0 %v339, 112
        %v574 = vpop.permute.xlu0 %573
        %575 = vrot.lane.b32.xlu0 %v339, 80
        %v576 = vpop.permute.xlu0 %575
        %v578 = vsel %vm343, %v574, 0
        %v581 = vsel %vm343, %v576, 0
        %583 = vmatprep.subr.bf16.mxu0 0
        %584 = vmatpush1.bf16.xpose.msra.mxu0 0
        %585 = vmatprep.subr.bf16.mxu0 0
        %586 = vmatpush1.bf16.xpose.msra.mxu0 0
        %587 = vmatprep.subr.bf16.mxu0 0
        %588 = vmatpush1.bf16.xpose.msra.mxu0 0
        %589 = vmatprep.subr.bf16.mxu0 0
        %590 = vmatpush1.bf16.xpose.msra.mxu0 0
        %591 = vmatprep.subr.bf16.mxu0 0
        %592 = vmatpush1.bf16.xpose.msra.mxu0 0
        %593 = vmatprep.subr.bf16.mxu0 0
        %594 = vmatpush1.bf16.xpose.msra.mxu0 0
        %595 = vmatprep.subr.bf16.mxu0 0
        %596 = vmatpush1.bf16.xpose.msra.mxu0 0
        %597 = vmatprep.subr.bf16.mxu0 0
        %598 = vmatpush1.bf16.xpose.msra.mxu0 %v581
        %599 = vmatprep.subr.bf16.mxu0 0
        %600 = vmatpush2.bf16.xpose.msra.mxu0 0
        %601 = vmatprep.subr.bf16.mxu0 0
        %602 = vmatpush2.bf16.xpose.msra.mxu0 0
        %603 = vmatprep.subr.bf16.mxu0 0
        %604 = vmatpush2.bf16.xpose.msra.mxu0 0
        %605 = vmatprep.subr.bf16.mxu0 0
        %606 = vmatpush2.bf16.xpose.msra.mxu0 0
        %607 = vmatprep.subr.bf16.mxu0 0
        %608 = vmatpush2.bf16.xpose.msra.mxu0 0
        %609 = vmatprep.subr.bf16.mxu0 0
        %610 = vmatpush2.bf16.xpose.msra.mxu0 0
        %611 = vmatprep.subr.bf16.mxu0 0
        %612 = vmatpush2.bf16.xpose.msra.mxu0 0
        %613 = vmatprep.subr.bf16.mxu0 0
        %614 = vmatpush2.bf16.xpose.msra.mxu0 0
        %615 = vmatprep.mubr.bf16.mxu0 0
        %616 = vmatmul.mubr.bf16.gmra.mxu0 %v578
        %v617 = vpop.f32.mrf.mxu0
        %v618 = vadd.f32 0.0, %v617
        %v619 = vpop.f32.mrf.mxu0
        %v620 = vpop.f32.mrf.mxu0
        %v621 = vpop.f32.mrf.mxu0
        %622 = vdwg.mxu0
        %v623 = vsel %vm343, %v618, -inf
        %624 = vmax.xlane.f32.xlu0 %v623
        %v625 = vpop.xlane.xlu0 %624
        %v626 = vsub.f32 %v618, %v625
        %v627 = vmul.f32 %v626, 1.442695
        %v628 = vpow.pop %v627
        %v629 = vsel %vm343, %v628, 0.0
        %630 = vadd.xlane.f32.xlu0 %v629
        %v631 = vpop.xlane.xlu0 %630
        %v632 = vrcp.pop %v631
        %v633 = vmul.f32 %v628, %v632
        %v634 = vpack.c.bf16 %v633, %v633
        %635 = vrot.lane.b32.xlu0 %v339, 48
        %v636 = vpop.permute.xlu0 %635
        %v638 = vsel %vm343, %v634, 0
        %v641 = vsel %vm407, %v636, 0
        %643 = vmatprep.subr.bf16.mxu0 0
        %644 = vmatpush1.bf16.msra.mxu0 0
        %645 = vmatprep.subr.bf16.mxu0 0
        %646 = vmatpush1.bf16.msra.mxu0 0
        %647 = vmatprep.subr.bf16.mxu0 0
        %648 = vmatpush1.bf16.msra.mxu0 0
        %649 = vmatprep.subr.bf16.mxu0 0
        %650 = vmatpush1.bf16.msra.mxu0 0
        %651 = vmatprep.subr.bf16.mxu0 0
        %652 = vmatpush1.bf16.msra.mxu0 0
        %653 = vmatprep.subr.bf16.mxu0 0
        %654 = vmatpush1.bf16.msra.mxu0 0
        %655 = vmatprep.subr.bf16.mxu0 0
        %656 = vmatpush1.bf16.msra.mxu0 0
        %657 = vmatprep.subr.bf16.mxu0 0
        %658 = vmatpush1.bf16.msra.mxu0 %v641
        %659 = vmatprep.subr.bf16.mxu0 0
        %660 = vmatpush2.bf16.msra.mxu0 0
        %661 = vmatprep.subr.bf16.mxu0 0
        %662 = vmatpush2.bf16.msra.mxu0 0
        %663 = vmatprep.subr.bf16.mxu0 0
        %664 = vmatpush2.bf16.msra.mxu0 0
        %665 = vmatprep.subr.bf16.mxu0 0
        %666 = vmatpush2.bf16.msra.mxu0 0
        %667 = vmatprep.subr.bf16.mxu0 0
        %668 = vmatpush2.bf16.msra.mxu0 0
        %669 = vmatprep.subr.bf16.mxu0 0
        %670 = vmatpush2.bf16.msra.mxu0 0
        %671 = vmatprep.subr.bf16.mxu0 0
        %672 = vmatpush2.bf16.msra.mxu0 0
        %673 = vmatprep.subr.bf16.mxu0 0
        %674 = vmatpush2.bf16.msra.mxu0 0
        %675 = vmatprep.mubr.bf16.mxu0 0
        %676 = vmatmul.mubr.bf16.gmra.mxu0 %v638
        %v677 = vpop.f32.mrf.mxu0
        %v678 = vadd.f32 0.0, %v677
        %v679 = vpop.f32.mrf.mxu0
        %v680 = vpop.f32.mrf.mxu0
        %v681 = vpop.f32.mrf.mxu0
        %682 = vdwg.mxu0
        %v683 = vpack.c.bf16 %v678, %v678
        %v685 = vunpack.c.l.b16 %v683
        %v686 = vpack.c.b16 %v685, %v685
        %687 = vrot.lane.b32.xlu0 %v686, 16
        %v688 = vpop.permute.xlu0 %687
        %vm690 = vcmask 191616
        %691 = vst.msk [vmem:[#allocation2] sm:$0xf] %vm690, %v688
        %692 = vrot.lane.b32.xlu0 %v339, 104
        %v693 = vpop.permute.xlu0 %692
        %694 = vrot.lane.b32.xlu0 %v339, 72
        %v695 = vpop.permute.xlu0 %694
        %v697 = vsel %vm343, %v693, 0
        %v700 = vsel %vm343, %v695, 0
        %702 = vmatprep.subr.bf16.mxu0 0
        %703 = vmatpush1.bf16.xpose.msra.mxu0 0
        %704 = vmatprep.subr.bf16.mxu0 0
        %705 = vmatpush1.bf16.xpose.msra.mxu0 0
        %706 = vmatprep.subr.bf16.mxu0 0
        %707 = vmatpush1.bf16.xpose.msra.mxu0 0
        %708 = vmatprep.subr.bf16.mxu0 0
        %709 = vmatpush1.bf16.xpose.msra.mxu0 0
        %710 = vmatprep.subr.bf16.mxu0 0
        %711 = vmatpush1.bf16.xpose.msra.mxu0 0
        %712 = vmatprep.subr.bf16.mxu0 0
        %713 = vmatpush1.bf16.xpose.msra.mxu0 0
        %714 = vmatprep.subr.bf16.mxu0 0
        %715 = vmatpush1.bf16.xpose.msra.mxu0 0
        %716 = vmatprep.subr.bf16.mxu0 0
        %717 = vmatpush1.bf16.xpose.msra.mxu0 %v700
        %718 = vmatprep.subr.bf16.mxu0 0
        %719 = vmatpush2.bf16.xpose.msra.mxu0 0
        %720 = vmatprep.subr.bf16.mxu0 0
        %721 = vmatpush2.bf16.xpose.msra.mxu0 0
        %722 = vmatprep.subr.bf16.mxu0 0
        %723 = vmatpush2.bf16.xpose.msra.mxu0 0
        %724 = vmatprep.subr.bf16.mxu0 0
        %725 = vmatpush2.bf16.xpose.msra.mxu0 0
        %726 = vmatprep.subr.bf16.mxu0 0
        %727 = vmatpush2.bf16.xpose.msra.mxu0 0
        %728 = vmatprep.subr.bf16.mxu0 0
        %729 = vmatpush2.bf16.xpose.msra.mxu0 0
        %730 = vmatprep.subr.bf16.mxu0 0
        %731 = vmatpush2.bf16.xpose.msra.mxu0 0
        %732 = vmatprep.subr.bf16.mxu0 0
        %733 = vmatpush2.bf16.xpose.msra.mxu0 0
        %734 = vmatprep.mubr.bf16.mxu0 0
        %735 = vmatmul.mubr.bf16.gmra.mxu0 %v697
        %v736 = vpop.f32.mrf.mxu0
        %v737 = vadd.f32 0.0, %v736
        %v738 = vpop.f32.mrf.mxu0
        %v739 = vpop.f32.mrf.mxu0
        %v740 = vpop.f32.mrf.mxu0
        %741 = vdwg.mxu0
        %v742 = vsel %vm343, %v737, -inf
        %743 = vmax.xlane.f32.xlu0 %v742
        %v744 = vpop.xlane.xlu0 %743
        %v745 = vsub.f32 %v737, %v744
        %v746 = vmul.f32 %v745, 1.442695
        %v747 = vpow.pop %v746
        %v748 = vsel %vm343, %v747, 0.0
        %749 = vadd.xlane.f32.xlu0 %v748
        %v750 = vpop.xlane.xlu0 %749
        %v751 = vrcp.pop %v750
        %v752 = vmul.f32 %v747, %v751
        %v753 = vpack.c.bf16 %v752, %v752
        %754 = vrot.lane.b32.xlu0 %v339, 40
        %v755 = vpop.permute.xlu0 %754
        %v757 = vsel %vm343, %v753, 0
        %v760 = vsel %vm407, %v755, 0
        %762 = vmatprep.subr.bf16.mxu0 0
        %763 = vmatpush1.bf16.msra.mxu0 0
        %764 = vmatprep.subr.bf16.mxu0 0
        %765 = vmatpush1.bf16.msra.mxu0 0
        %766 = vmatprep.subr.bf16.mxu0 0
        %767 = vmatpush1.bf16.msra.mxu0 0
        %768 = vmatprep.subr.bf16.mxu0 0
        %769 = vmatpush1.bf16.msra.mxu0 0
        %770 = vmatprep.subr.bf16.mxu0 0
        %771 = vmatpush1.bf16.msra.mxu0 0
        %772 = vmatprep.subr.bf16.mxu0 0
        %773 = vmatpush1.bf16.msra.mxu0 0
        %774 = vmatprep.subr.bf16.mxu0 0
        %775 = vmatpush1.bf16.msra.mxu0 0
        %776 = vmatprep.subr.bf16.mxu0 0
        %777 = vmatpush1.bf16.msra.mxu0 %v760
        %778 = vmatprep.subr.bf16.mxu0 0
        %779 = vmatpush2.bf16.msra.mxu0 0
        %780 = vmatprep.subr.bf16.mxu0 0
        %781 = vmatpush2.bf16.msra.mxu0 0
        %782 = vmatprep.subr.bf16.mxu0 0
        %783 = vmatpush2.bf16.msra.mxu0 0
        %784 = vmatprep.subr.bf16.mxu0 0
        %785 = vmatpush2.bf16.msra.mxu0 0
        %786 = vmatprep.subr.bf16.mxu0 0
        %787 = vmatpush2.bf16.msra.mxu0 0
        %788 = vmatprep.subr.bf16.mxu0 0
        %789 = vmatpush2.bf16.msra.mxu0 0
        %790 = vmatprep.subr.bf16.mxu0 0
        %791 = vmatpush2.bf16.msra.mxu0 0
        %792 = vmatprep.subr.bf16.mxu0 0
        %793 = vmatpush2.bf16.msra.mxu0 0
        %794 = vmatprep.mubr.bf16.mxu0 0
        %795 = vmatmul.mubr.bf16.gmra.mxu0 %v757
        %v796 = vpop.f32.mrf.mxu0
        %v797 = vadd.f32 0.0, %v796
        %v798 = vpop.f32.mrf.mxu0
        %v799 = vpop.f32.mrf.mxu0
        %v800 = vpop.f32.mrf.mxu0
        %801 = vdwg.mxu0
        %v802 = vpack.c.bf16 %v797, %v797
        %v804 = vunpack.c.l.b16 %v802
        %v805 = vpack.c.b16 %v804, %v804
        %806 = vrot.lane.b32.xlu0 %v805, 24
        %v807 = vpop.permute.xlu0 %806
        %vm809 = vcmask 257216
        %810 = vst.msk [vmem:[#allocation2] sm:$0xf] %vm809, %v807
        %v811 = vld [vmem:[#allocation2] sm:$0xf]
        %v812 = vld [vmem:[#allocation8] sm:$0xf]
        %v813 = vld [vmem:[#allocation8 + $0x4] sm:$0xf]
        %v814 = vld [vmem:[#allocation8 + $0x8] sm:$0xf]
        %v815 = vld [vmem:[#allocation8 + $0xc] sm:$0xf]
        %v816 = vld [vmem:[%s4] sm:$0x1]
        %v818 = vlaneseq
        %v819 = vshrl.u32 %v818, 7
        %v820 = vsub.s32 0, %v819
        %v821 = vrot.slane %v816, %v820
        %v827 = vunpack.c.l.b16 %v812
        %v828 = vunpack.c.l.b16 %v813
        %v829 = vunpack.c.l.b16 %v814
        %v830 = vunpack.c.l.b16 %v815
        %v831 = vpack.c.b16 %v828, %v827
        %v832 = vpack.c.b16 %v830, %v829
        %v836 = vsel %vm295, %v811, 0
        %838 = vmatprep.subr.bf16.mxu0 0
        %839 = vmatpush1.bf16.msra.mxu0 0
        %840 = vmatprep.subr.bf16.mxu0 0
        %841 = vmatpush1.bf16.msra.mxu0 0
        %842 = vmatprep.subr.bf16.mxu0 0
        %843 = vmatpush1.bf16.msra.mxu0 0
        %844 = vmatprep.subr.bf16.mxu0 0
        %845 = vmatpush1.bf16.msra.mxu0 0
        %846 = vmatprep.subr.bf16.mxu0 0
        %847 = vmatpush1.bf16.msra.mxu0 0
        %848 = vmatprep.subr.bf16.mxu0 0
        %849 = vmatpush1.bf16.msra.mxu0 0
        %850 = vmatprep.subr.bf16.mxu0 0
        %851 = vmatpush1.bf16.msra.mxu0 %v832
        %852 = vmatprep.subr.bf16.mxu0 0
        %853 = vmatpush1.bf16.msra.mxu0 %v831
        %854 = vmatprep.subr.bf16.mxu0 0
        %855 = vmatpush2.bf16.msra.mxu0 0
        %856 = vmatprep.subr.bf16.mxu0 0
        %857 = vmatpush2.bf16.msra.mxu0 0
        %858 = vmatprep.subr.bf16.mxu0 0
        %859 = vmatpush2.bf16.msra.mxu0 0
        %860 = vmatprep.subr.bf16.mxu0 0
        %861 = vmatpush2.bf16.msra.mxu0 0
        %862 = vmatprep.subr.bf16.mxu0 0
        %863 = vmatpush2.bf16.msra.mxu0 0
        %864 = vmatprep.subr.bf16.mxu0 0
        %865 = vmatpush2.bf16.msra.mxu0 0
        %866 = vmatprep.subr.bf16.mxu0 0
        %867 = vmatpush2.bf16.msra.mxu0 0
        %868 = vmatprep.subr.bf16.mxu0 0
        %869 = vmatpush2.bf16.msra.mxu0 0
        %870 = vmatprep.mubr.bf16.mxu0 0
        %871 = vmatmul.mubr.bf16.gmra.mxu0 %v836
        %v872 = vpop.f32.mrf.mxu0
        %v873 = vadd.f32 %v821, %v872
        %v874 = vpop.f32.mrf.mxu0
        %v875 = vpop.f32.mrf.mxu0
        %v876 = vpop.f32.mrf.mxu0
        %877 = vdwg.mxu0
        %878 = vst.msk [vmem:[%s268] sm:$0xff] %vm295, %v873
        %s879 = sand.u32 %s141, 1
        %s880 = scalar_lea.sflag [#allocation5], %s879
        %s881 = sand.u32 %s141, 1
        %s882 = smul.addr %s881, 8
        %s883 = scalar_lea.vmem [#allocation9], %s882
        // Predicated region
        $region53: #{tpu_custom_call.1} parent=39 // pred_check
          %p884 = pneg %p151
        $region54: #{tpu_custom_call.1} parent=39 // pred_check_branch
          %886 = sbr.rel (%p884) target = $region56
        $region55: #{tpu_custom_call.1} parent=39 // pred_region
          %s888 = ssub.s32 128, 128
          %889 = vsyncadd %s880, %s888
          %s890 = smul.addr %s23, 128
          %s891 = scalar_lea.hbm %s5, %s890
          %s893 = sshll.u32 %s883, 4
          %s894 = int_to_ptr.vmem [resolvable:$true] %s893
          %896 = dma.vmem_to_hbm [thread:$0]  %s894, 128, %s891, %s880
        $region56: #{tpu_custom_call.1} parent=39 // pred_fallthru
          _
      $region40: #{tpu_custom_call.1} parent=5 // pred_fallthru
        _
      %p897 = scmp.le.s32.totalorder 2, %s18
      // Predicated region
      $region57: #{tpu_custom_call.1} parent=5 // pred_check
        %p898 = pneg %p897
      $region58: #{tpu_custom_call.1} parent=5 // pred_check_branch
        %900 = sbr.rel (%p898) target = $region60
      $region59: #{tpu_custom_call.1} parent=5 // pred_region
        %s901 = ssub.s32 %s18, 2
        // Predicated region
        $region61: #{tpu_custom_call.1} parent=59 // pred_check
          %p902 = pneg %p157
        $region62: #{tpu_custom_call.1} parent=59 // pred_check_branch
          %904 = sbr.rel (%p902) target = $region64
        $region63: #{tpu_custom_call.1} parent=59 // pred_region
          %s905 = sand.u32 %s142, 1
          %s906 = scalar_lea.sflag [#allocation5], %s905
          %s907 = sand.u32 %s142, 1
          %s908 = smul.addr %s907, 8
          %s909 = scalar_lea.vmem [#allocation9], %s908
          %910 = dma.done %s906, 128
        $region64: #{tpu_custom_call.1} parent=59 // pred_fallthru
          _
      $region60: #{tpu_custom_call.1} parent=5 // pred_fallthru
        _
    $region6: #{tpu_custom_call.1} parent=1 // loop_footer
      %s22 = sadd.s32 1, %s18
    $region7: #{tpu_custom_call.1} parent=1 // loop_footer_branch
      %17 = sbr.rel target = $region3
    $region8: #{tpu_custom_call.1} parent=1 // loop_exit
      _
    %911 = vsyncpa [#allocation4], 1
    %s912 = scalar_lea.sflag [#allocation4], 1
    %913 = vsyncpa %s912, 1
    %914 = vsyncpa [#allocation7], 1
    %915 = vsyncpa [#allocation5], 1
    %s916 = scalar_lea.sflag [#allocation5], 1
    %917 = vsyncpa %s916, 1

</llo_original>
